<compile_context>
chip_gen: v7x
topology: tpu7x:2x2x1
jax: 0.10.0
libtpu: 0.0.40
codegen_flags: <defaults>
</compile_context>

<pallas_src>
import functools

import jax
import jax.numpy as jnp
from jax.experimental import pallas as pl
from jax.experimental.pallas import tpu as pltpu


def _round_up(n, m):
    return ((n + m - 1) // m) * m


def _token_detection_kernel(x_ref, w1_ref, b1_ref, g_ref, beta_ref,
                            w2_ref, b2_ref, o_ref, *, eps):
    # x_ref: (tile_n, H) f32, w1_ref: (H, H) in compute dtype (bf16 default),
    # b1/g/beta: (1, H) f32, w2_ref: (2, H) f32, b2_ref: (1, 2) f32,
    # o_ref: (tile_n, 2) f32.

    # Cast the activation tile to the weight's compute dtype so the big matmul
    # takes the native (bf16) MXU path; accumulate in f32.
    x = x_ref[...].astype(w1_ref.dtype)
    h = jnp.dot(x, w1_ref[...], preferred_element_type=jnp.float32)
    h = h + b1_ref[...]

    # exact (erf-based) gelu in f32, matching HF default "gelu"
    h = 0.5 * h * (1.0 + jax.lax.erf(h * 0.7071067811865476))

    # LayerNorm in f32
    mean = jnp.mean(h, axis=-1, keepdims=True)
    centered = h - mean
    var = jnp.mean(centered * centered, axis=-1, keepdims=True)
    h = centered * jax.lax.rsqrt(var + eps) * g_ref[...] + beta_ref[...]

    # decoder Linear(H -> 2): two VPU multiply + lane-reduce ops instead of a
    # 98%-zero (H,128) padded MXU matmul; VPU/XLU slots are free while the MXU
    # is busy with the dense matmul of the pipelined next tile.
    l0 = jnp.sum(h * w2_ref[0:1, :], axis=-1, keepdims=True)   # (tile_n, 1)
    l1 = jnp.sum(h * w2_ref[1:2, :], axis=-1, keepdims=True)   # (tile_n, 1)
    lane = jax.lax.broadcasted_iota(jnp.int32, o_ref.shape, 1)  # (tile_n, 2)
    o_ref[...] = jnp.where(lane == 0, l0, l1) + b2_ref[...]


def prepare_token_detection_params(params, compute_dtype=jnp.bfloat16):
    """One-time parameter preparation (transpose / reshape / cast).

    Call once per parameter set and reuse the result across forward calls so
    the HxH transpose and casts never run in the hot path.
    """
    H = params["dense_w"].shape[0]
    return {
        "w1": jnp.asarray(params["dense_w"]).T.astype(compute_dtype),       # (H, H)
        "b1": jnp.asarray(params["dense_b"], jnp.float32).reshape(1, H),
        "g": jnp.asarray(params["ln_w"], jnp.float32).reshape(1, H),
        "beta": jnp.asarray(params["ln_b"], jnp.float32).reshape(1, H),
        "w2": jnp.asarray(params["dec_w"], jnp.float32),                     # (2, H)
        "b2": jnp.asarray(params["dec_b"], jnp.float32).reshape(1, 2),
    }


def bert_token_detection_head(hidden_states, prepared, *, eps=1e-12, tile_n=256):
    """hidden_states: (B, S, H) float32 -> logits (B, S, 2) float32."""
    B, S, H = hidden_states.shape
    N = B * S

    # Big tiles keep the MXU busy and amortize the ~0.35us/step grid overhead;
    # clamp to the (8-aligned) token count so tiny test shapes still work, and
    # pad the token axis instead of asserting divisibility.
    tile = min(tile_n, _round_up(N, 8))
    n_pad = _round_up(N, tile)

    x2d = hidden_states.reshape(N, H)
    if n_pad != N:
        x2d = jnp.pad(x2d, ((0, n_pad - N), (0, 0)))

    grid = (n_pad // tile,)
    kernel = functools.partial(_token_detection_kernel, eps=eps)

    out = pl.pallas_call(
        kernel,
        out_shape=jax.ShapeDtypeStruct((n_pad, 2), jnp.float32),
        grid_spec=pltpu.PrefetchScalarGridSpec(
            num_scalar_prefetch=0,
            grid=grid,
            in_specs=[
                pl.BlockSpec((tile, H), lambda i: (i, 0)),   # activation tile
                pl.BlockSpec((H, H), lambda i: (0, 0)),      # dense weight (resident)
                pl.BlockSpec((1, H), lambda i: (0, 0)),      # dense bias
                pl.BlockSpec((1, H), lambda i: (0, 0)),      # LN weight
                pl.BlockSpec((1, H), lambda i: (0, 0)),      # LN bias
                pl.BlockSpec((2, H), lambda i: (0, 0)),      # decoder weight
                pl.BlockSpec((1, 2), lambda i: (0, 0)),      # decoder bias
            ],
            out_specs=pl.BlockSpec((tile, 2), lambda i: (i, 0)),
        ),
        compiler_params=pltpu.CompilerParams(
            dimension_semantics=("parallel",)),   # shards token tiles across v7x TCs
    )(x2d, prepared["w1"], prepared["b1"], prepared["g"], prepared["beta"],
      prepared["w2"], prepared["b2"])

    return out[:N].reshape(B, S, 2)


def _reference(hidden_states, params, eps=1e-12):
    """Pure-JAX f32 reference mirroring the PyTorch module."""
    x = hidden_states
    h = jnp.einsum("bsh,oh->bso", x, params["dense_w"]) + params["dense_b"]
    h = 0.5 * h * (1.0 + jax.lax.erf(h / jnp.sqrt(2.0)))
    mean = jnp.mean(h, axis=-1, keepdims=True)
    var = jnp.mean((h - mean) ** 2, axis=-1, keepdims=True)
    h = (h - mean) / jnp.sqrt(var + eps) * params["ln_w"] + params["ln_b"]
    return jnp.einsum("bsh,oh->bso", h, params["dec_w"]) + params["dec_b"]


def _make_params(key, H):
    k_w1, k_b1, k_lnw, k_lnb, k_w2 = jax.random.split(key, 5)
    return {
        # BertPredictionHeadTransform.dense : Linear(H, H)
        "dense_w": jax.random.normal(k_w1, (H, H), jnp.float32) * 0.05,
        "dense_b": jax.random.normal(k_b1, (H,), jnp.float32) * 0.05,
        # BertPredictionHeadTransform.LayerNorm(H)
        "ln_w": 1.0 + 0.05 * jax.random.normal(k_lnw, (H,), jnp.float32),
        "ln_b": 0.05 * jax.random.normal(k_lnb, (H,), jnp.float32),
        # decoder : Linear(H, 2, bias=False) with tied zeros(2) bias
        "dec_w": jax.random.normal(k_w2, (2, H), jnp.float32) * 0.05,
        "dec_b": jnp.zeros((2,), jnp.float32),
    }


if __name__ == "__main__":
    H = 32
    key = jax.random.PRNGKey(0)
    k_p, k_x1, k_x2 = jax.random.split(key, 3)

    params = _make_params(k_p, H)
    prepared_f32 = prepare_token_detection_params(params, compute_dtype=jnp.float32)
    prepared_bf16 = prepare_token_detection_params(params, compute_dtype=jnp.bfloat16)

    # --- case 1: B=2, S=8 (single tile), f32 compute path, tight tolerance ---
    x1 = jax.random.normal(k_x1, (2, 8, H), dtype=jnp.float32)
    ref1 = _reference(x1, params)

    out_f32 = jax.block_until_ready(bert_token_detection_head(x1, prepared_f32))
    assert out_f32.shape == (2, 8, 2), out_f32.shape
    assert jnp.allclose(out_f32, ref1, atol=1e-4, rtol=1e-4), \
        float(jnp.max(jnp.abs(out_f32 - ref1)))

    # --- case 1b: bf16-MXU path (production default), looser tolerance ---
    out_bf16 = jax.block_until_ready(bert_token_detection_head(x1, prepared_bf16))
    assert jnp.allclose(out_bf16, ref1, atol=2e-2, rtol=2e-2), \
        float(jnp.max(jnp.abs(out_bf16 - ref1)))

    # --- case 2: multi-tile grid (force tile_n=8 so grid length > 1) ---
    out_mt = jax.block_until_ready(
        bert_token_detection_head(x1, prepared_f32, tile_n=8))
    assert jnp.allclose(out_mt, ref1, atol=1e-4, rtol=1e-4), \
        float(jnp.max(jnp.abs(out_mt - ref1)))

    # --- case 3: token count not a multiple of the tile (exercises padding) ---
    x2 = jax.random.normal(k_x2, (2, 7, H), dtype=jnp.float32)
    ref2 = _reference(x2, params)
    out_pad = jax.block_until_ready(bert_token_detection_head(x2, prepared_f32))
    assert out_pad.shape == (2, 7, 2), out_pad.shape
    assert jnp.allclose(out_pad, ref2, atol=1e-4, rtol=1e-4), \
        float(jnp.max(jnp.abs(out_pad - ref2)))

    print("KERNEL_OK")
</pallas_src>

<mosaic_0001>
module attributes {stable_mosaic.version = 11 : i64} {
  func.func @_token_detection_kernel(%arg0: i32, %arg1: memref<16x32xf32, #tpu.memory_space<vmem>>, %arg2: memref<32x32xf32, #tpu.memory_space<vmem>>, %arg3: memref<1x32xf32, #tpu.memory_space<vmem>>, %arg4: memref<1x32xf32, #tpu.memory_space<vmem>>, %arg5: memref<1x32xf32, #tpu.memory_space<vmem>>, %arg6: memref<2x32xf32, #tpu.memory_space<vmem>>, %arg7: memref<1x2xf32, #tpu.memory_space<vmem>>, %arg8: memref<16x2xf32, #tpu.memory_space<vmem>>) attributes {dimension_semantics = [#tpu.dimension_semantics<parallel>], iteration_bounds = array<i64: 1>, scalar_prefetch = 0 : i64, scratch_operands = 0 : i64, tpu.core_type = #tpu.core_type<tc>, window_params = [{transform_indices = @transform_0, window_bounds = array<i64: 16, 32>}, {pipeline_mode = #tpu.pipeline_mode<synchronous>, transform_indices = @transform_1, window_bounds = array<i64: 32, 32>}, {pipeline_mode = #tpu.pipeline_mode<synchronous>, transform_indices = @transform_2, window_bounds = array<i64: 1, 32>}, {pipeline_mode = #tpu.pipeline_mode<synchronous>, transform_indices = @transform_3, window_bounds = array<i64: 1, 32>}, {pipeline_mode = #tpu.pipeline_mode<synchronous>, transform_indices = @transform_4, window_bounds = array<i64: 1, 32>}, {pipeline_mode = #tpu.pipeline_mode<synchronous>, transform_indices = @transform_5, window_bounds = array<i64: 2, 32>}, {pipeline_mode = #tpu.pipeline_mode<synchronous>, transform_indices = @transform_6, window_bounds = array<i64: 1, 2>}, {transform_indices = @transform_7, window_bounds = array<i64: 16, 2>}]} {
    %c0 = arith.constant 0 : index
    %c0_0 = arith.constant 0 : index
    %0 = vector.load %arg1[%c0, %c0_0] : memref<16x32xf32, #tpu.memory_space<vmem>>, vector<16x32xf32>
    %c0_1 = arith.constant 0 : index
    %c0_2 = arith.constant 0 : index
    %1 = vector.load %arg2[%c0_1, %c0_2] : memref<32x32xf32, #tpu.memory_space<vmem>>, vector<32x32xf32>
    %cst = arith.constant dense<0.000000e+00> : vector<16x32xf32>
    %2 = tpu.matmul %0, %1, %cst {dimension_numbers = #tpu.dot_dimension_numbers<[1], [0], [0], [1], [0, 0, 1, 1], [], []>} : vector<16x32xf32>, vector<32x32xf32>, vector<16x32xf32> -> vector<16x32xf32>
    %c0_3 = arith.constant 0 : index
    %c0_4 = arith.constant 0 : index
    %3 = vector.load %arg3[%c0_3, %c0_4] : memref<1x32xf32, #tpu.memory_space<vmem>>, vector<1x32xf32>
    %4 = vector.broadcast %3 : vector<1x32xf32> to vector<16x32xf32>
    %5 = arith.addf %2, %4 : vector<16x32xf32>
    %cst_5 = arith.constant 5.000000e-01 : f32
    %6 = vector.broadcast %cst_5 : f32 to vector<16x32xf32>
    %7 = arith.mulf %6, %5 : vector<16x32xf32>
    %cst_6 = arith.constant 0.707106769 : f32
    %8 = vector.broadcast %cst_6 : f32 to vector<16x32xf32>
    %9 = arith.mulf %5, %8 : vector<16x32xf32>
    %10 = math.erf %9 : vector<16x32xf32>
    %cst_7 = arith.constant 1.000000e+00 : f32
    %11 = vector.broadcast %cst_7 : f32 to vector<16x32xf32>
    %12 = arith.addf %11, %10 : vector<16x32xf32>
    %13 = arith.mulf %7, %12 : vector<16x32xf32>
    %cst_8 = arith.constant dense<0.000000e+00> : vector<16xf32>
    %14 = vector.multi_reduction <add>, %13, %cst_8 [1] : vector<16x32xf32> to vector<16xf32>
    %15 = vector.shape_cast %14 : vector<16xf32> to vector<16x1xf32>
    %cst_9 = arith.constant 3.200000e+01 : f32
    %16 = vector.broadcast %cst_9 : f32 to vector<16x1xf32>
    %17 = arith.divf %15, %16 : vector<16x1xf32>
    %18 = vector.broadcast %17 : vector<16x1xf32> to vector<16x32xf32>
    %19 = arith.subf %13, %18 : vector<16x32xf32>
    %20 = arith.mulf %19, %19 : vector<16x32xf32>
    %cst_10 = arith.constant dense<0.000000e+00> : vector<16xf32>
    %21 = vector.multi_reduction <add>, %20, %cst_10 [1] : vector<16x32xf32> to vector<16xf32>
    %22 = vector.shape_cast %21 : vector<16xf32> to vector<16x1xf32>
    %cst_11 = arith.constant 3.200000e+01 : f32
    %23 = vector.broadcast %cst_11 : f32 to vector<16x1xf32>
    %24 = arith.divf %22, %23 : vector<16x1xf32>
    %cst_12 = arith.constant 9.99999996E-13 : f32
    %25 = vector.broadcast %cst_12 : f32 to vector<16x1xf32>
    %26 = arith.addf %24, %25 : vector<16x1xf32>
    %27 = math.rsqrt %26 : vector<16x1xf32>
    %28 = vector.broadcast %27 : vector<16x1xf32> to vector<16x32xf32>
    %29 = arith.mulf %19, %28 : vector<16x32xf32>
    %c0_13 = arith.constant 0 : index
    %c0_14 = arith.constant 0 : index
    %30 = vector.load %arg4[%c0_13, %c0_14] : memref<1x32xf32, #tpu.memory_space<vmem>>, vector<1x32xf32>
    %31 = vector.broadcast %30 : vector<1x32xf32> to vector<16x32xf32>
    %32 = arith.mulf %29, %31 : vector<16x32xf32>
    %c0_15 = arith.constant 0 : index
    %c0_16 = arith.constant 0 : index
    %33 = vector.load %arg5[%c0_15, %c0_16] : memref<1x32xf32, #tpu.memory_space<vmem>>, vector<1x32xf32>
    %34 = vector.broadcast %33 : vector<1x32xf32> to vector<16x32xf32>
    %35 = arith.addf %32, %34 : vector<16x32xf32>
    %c0_17 = arith.constant 0 : index
    %c0_18 = arith.constant 0 : index
    %36 = vector.load %arg6[%c0_17, %c0_18] : memref<2x32xf32, #tpu.memory_space<vmem>>, vector<1x32xf32>
    %37 = vector.broadcast %36 : vector<1x32xf32> to vector<16x32xf32>
    %38 = arith.mulf %35, %37 : vector<16x32xf32>
    %cst_19 = arith.constant dense<0.000000e+00> : vector<16xf32>
    %39 = vector.multi_reduction <add>, %38, %cst_19 [1] : vector<16x32xf32> to vector<16xf32>
    %40 = vector.shape_cast %39 : vector<16xf32> to vector<16x1xf32>
    %c1 = arith.constant 1 : index
    %c0_20 = arith.constant 0 : index
    %41 = vector.load %arg6[%c1, %c0_20] : memref<2x32xf32, #tpu.memory_space<vmem>>, vector<1x32xf32>
    %42 = vector.broadcast %41 : vector<1x32xf32> to vector<16x32xf32>
    %43 = arith.mulf %35, %42 : vector<16x32xf32>
    %cst_21 = arith.constant dense<0.000000e+00> : vector<16xf32>
    %44 = vector.multi_reduction <add>, %43, %cst_21 [1] : vector<16x32xf32> to vector<16xf32>
    %45 = vector.shape_cast %44 : vector<16xf32> to vector<16x1xf32>
    %46 = tpu.iota {dimensions = array<i32: 1>} : vector<16x2xi32>
    %c0_i32 = arith.constant 0 : i32
    %47 = vector.broadcast %c0_i32 : i32 to vector<16x2xi32>
    %48 = arith.cmpi eq, %46, %47 : vector<16x2xi32>
    %49 = vector.shape_cast %40 : vector<16x1xf32> to vector<16x1xf32>
    %50 = vector.broadcast %49 : vector<16x1xf32> to vector<16x2xf32>
    %51 = vector.shape_cast %45 : vector<16x1xf32> to vector<16x1xf32>
    %52 = vector.broadcast %51 : vector<16x1xf32> to vector<16x2xf32>
    %53 = arith.select %48, %50, %52 : vector<16x2xi1>, vector<16x2xf32>
    %c0_22 = arith.constant 0 : index
    %c0_23 = arith.constant 0 : index
    %54 = vector.load %arg7[%c0_22, %c0_23] : memref<1x2xf32, #tpu.memory_space<vmem>>, vector<1x2xf32>
    %55 = vector.broadcast %54 : vector<1x2xf32> to vector<16x2xf32>
    %56 = arith.addf %53, %55 : vector<16x2xf32>
    %c0_24 = arith.constant 0 : index
    %c0_25 = arith.constant 0 : index
    %57 = vector.load %arg8[%c0_24, %c0_25] : memref<16x2xf32, #tpu.memory_space<vmem>>, vector<16x2xf32>
    tpu.vector_store %arg8[%c0_24, %c0_25], %56 {strides = array<i32>} : memref<16x2xf32, #tpu.memory_space<vmem>>, vector<16x2xf32>,
    return
  }
  func.func @transform_0(%arg0: i32) -> (i32, i32) {
    %c0_i32 = arith.constant 0 : i32
    %c0_i32_0 = arith.constant 0 : i32
    return %arg0, %c0_i32 : i32, i32
  }
  func.func @transform_1(%arg0: i32) -> (i32, i32) {
    %c0_i32 = arith.constant 0 : i32
    %c0_i32_0 = arith.constant 0 : i32
    %c0_i32_1 = arith.constant 0 : i32
    return %c0_i32, %c0_i32_0 : i32, i32
  }
  func.func @transform_2(%arg0: i32) -> (i32, i32) {
    %c0_i32 = arith.constant 0 : i32
    %c0_i32_0 = arith.constant 0 : i32
    %c0_i32_1 = arith.constant 0 : i32
    return %c0_i32, %c0_i32_0 : i32, i32
  }
  func.func @transform_3(%arg0: i32) -> (i32, i32) {
    %c0_i32 = arith.constant 0 : i32
    %c0_i32_0 = arith.constant 0 : i32
    %c0_i32_1 = arith.constant 0 : i32
    return %c0_i32, %c0_i32_0 : i32, i32
  }
  func.func @transform_4(%arg0: i32) -> (i32, i32) {
    %c0_i32 = arith.constant 0 : i32
    %c0_i32_0 = arith.constant 0 : i32
    %c0_i32_1 = arith.constant 0 : i32
    return %c0_i32, %c0_i32_0 : i32, i32
  }
  func.func @transform_5(%arg0: i32) -> (i32, i32) {
    %c0_i32 = arith.constant 0 : i32
    %c0_i32_0 = arith.constant 0 : i32
    %c0_i32_1 = arith.constant 0 : i32
    return %c0_i32, %c0_i32_0 : i32, i32
  }
  func.func @transform_6(%arg0: i32) -> (i32, i32) {
    %c0_i32 = arith.constant 0 : i32
    %c0_i32_0 = arith.constant 0 : i32
    %c0_i32_1 = arith.constant 0 : i32
    return %c0_i32, %c0_i32_0 : i32, i32
  }
  func.func @transform_7(%arg0: i32) -> (i32, i32) {
    %c0_i32 = arith.constant 0 : i32
    %c0_i32_0 = arith.constant 0 : i32
    return %arg0, %c0_i32 : i32, i32
  }
}

</mosaic_0001>

<llo_original>
// kernel: tpu_custom_call.1
$region0: #{tpu_custom_call.1}
  #allocation0 [shape = 'u32[]', space=smem, size = 0x4, offset = 0x4, fixed_abs, tag = 'smem constant byte address 0x4 - core index']
  #allocation1 [shape = 'u32[144,128]{1,0:T(1,128)}', space=vmem, size = 0x12000, scoped, tag = 'internal scratch']
  %s0 = inlined_call_operand.hbm [shape: f32[16,32], index: 0, kind: input, shape index: {}]
  %s1 = inlined_call_operand.hbm [shape: f32[32,32], index: 1, kind: input, shape index: {}]
  %s2 = inlined_call_operand.vmem [shape: f32[1,32], index: 2, kind: input, shape index: {}]
  %s3 = inlined_call_operand.vmem [shape: f32[1,32], index: 3, kind: input, shape index: {}]
  %s4 = inlined_call_operand.vmem [shape: f32[1,32], index: 4, kind: input, shape index: {}]
  %s5 = inlined_call_operand.vmem [shape: f32[2,32], index: 5, kind: input, shape index: {}]
  %s6 = inlined_call_operand.vmem [shape: f32[1,2], index: 6, kind: input, shape index: {}]
  %s7 = inlined_call_operand.vmem [shape: f32[16,2], index: 7, kind: output, shape index: {}]
  %s8 = sld [smem:[#allocation0]]
  $region46: #{tpu_custom_call.1} parent=0
    _
  %s10 = ssub.s32 1, %s8
  %s11 = scalar_select 0, %s10, %s8
  $region1: #{tpu_custom_call.1} parent=0
    #allocation2 [shape = 'u8[8192]{0}', space=vmem, size = 0x2000, scoped, tag = 'input window, operand 0, single buffered']
    #allocation3 [shape = 's32[1]{0}', space=sflag, size = 0x4, scoped, tag = 'scoped memory for tpu_custom_call.1']
    #allocation4 [shape = 'u8[16384]{0}', space=vmem, size = 0x4000, scoped, tag = 'input window, operand 1, single buffered']
    #allocation5 [shape = 's32[1]{0}', space=sflag, size = 0x4, scoped, tag = 'scoped memory for tpu_custom_call.1']
    %12 = vsyncpa [#allocation3], 0
    %13 = vsyncpa [#allocation5], 0
    // Predicated region
    $region2: #{tpu_custom_call.1} parent=1 // pred_check
      _
    $region3: #{tpu_custom_call.1} parent=1 // pred_check_branch
      %15 = sbr.rel (0) target = $region5
    $region4: #{tpu_custom_call.1} parent=1 // pred_region
      %s17 = ssub.s32 256, 256
      %18 = vsyncadd [#allocation3], %s17
      %s19 = sshll.u32 [#allocation2], 4
      %s20 = int_to_ptr.vmem [resolvable:$true] %s19
      %25 = dma.hbm_to_vmem [thread:$0]  %s0, 256, %s20, [#allocation3], 128, 128, 8
    $region5: #{tpu_custom_call.1} parent=1 // pred_fallthru
      _
    // Predicated region
    $region6: #{tpu_custom_call.1} parent=1 // pred_check
      _
    $region7: #{tpu_custom_call.1} parent=1 // pred_check_branch
      %27 = sbr.rel (0) target = $region9
    $region8: #{tpu_custom_call.1} parent=1 // pred_region
      %s29 = ssub.s32 512, 512
      %30 = vsyncadd [#allocation5], %s29
      %s31 = sshll.u32 [#allocation4], 4
      %s32 = int_to_ptr.vmem [resolvable:$true] %s31
      %37 = dma.hbm_to_vmem [thread:$0]  %s1, 512, %s32, [#allocation5], 128, 128, 8
    $region9: #{tpu_custom_call.1} parent=1 // pred_fallthru
      _
    // Predicated region
    $region10: #{tpu_custom_call.1} parent=1 // pred_check
      _
    $region11: #{tpu_custom_call.1} parent=1 // pred_check_branch
      %39 = sbr.rel (0) target = $region13
    $region12: #{tpu_custom_call.1} parent=1 // pred_region
      _
    $region13: #{tpu_custom_call.1} parent=1 // pred_fallthru
      _
    // Predicated region
    $region14: #{tpu_custom_call.1} parent=1 // pred_check
      _
    $region15: #{tpu_custom_call.1} parent=1 // pred_check_branch
      %41 = sbr.rel (0) target = $region17
    $region16: #{tpu_custom_call.1} parent=1 // pred_region
      _
    $region17: #{tpu_custom_call.1} parent=1 // pred_fallthru
      _
    // Predicated region
    $region18: #{tpu_custom_call.1} parent=1 // pred_check
      _
    $region19: #{tpu_custom_call.1} parent=1 // pred_check_branch
      %43 = sbr.rel (0) target = $region21
    $region20: #{tpu_custom_call.1} parent=1 // pred_region
      _
    $region21: #{tpu_custom_call.1} parent=1 // pred_fallthru
      _
    // Predicated region
    $region22: #{tpu_custom_call.1} parent=1 // pred_check
      _
    $region23: #{tpu_custom_call.1} parent=1 // pred_check_branch
      %45 = sbr.rel (0) target = $region25
    $region24: #{tpu_custom_call.1} parent=1 // pred_region
      _
    $region25: #{tpu_custom_call.1} parent=1 // pred_fallthru
      _
    // Predicated region
    $region26: #{tpu_custom_call.1} parent=1 // pred_check
      _
    $region27: #{tpu_custom_call.1} parent=1 // pred_check_branch
      %47 = sbr.rel (0) target = $region29
    $region28: #{tpu_custom_call.1} parent=1 // pred_region
      _
    $region29: #{tpu_custom_call.1} parent=1 // pred_fallthru
      _
    // Predicated region
    $region30: #{tpu_custom_call.1} parent=1 // pred_check
      _
    $region31: #{tpu_custom_call.1} parent=1 // pred_check_branch
      %49 = sbr.rel (0) target = $region33
    $region32: #{tpu_custom_call.1} parent=1 // pred_region
      %50 = dma.done [#allocation3], 256
    $region33: #{tpu_custom_call.1} parent=1 // pred_fallthru
      _
    // Predicated region
    $region34: #{tpu_custom_call.1} parent=1 // pred_check
      _
    $region35: #{tpu_custom_call.1} parent=1 // pred_check_branch
      %52 = sbr.rel (0) target = $region37
    $region36: #{tpu_custom_call.1} parent=1 // pred_region
      %53 = dma.done [#allocation5], 512
    $region37: #{tpu_custom_call.1} parent=1 // pred_fallthru
      _
    %v54 = vld [vmem:[#allocation2] sm:$0xff]
    %v55 = vld [vmem:[#allocation2 + $0x8] sm:$0xff]
    %v56 = vld [vmem:[#allocation4] sm:$0xff]
    %v57 = vld [vmem:[#allocation4 + $0x8] sm:$0xff]
    %v58 = vld [vmem:[#allocation4 + $0x10] sm:$0xff]
    %v59 = vld [vmem:[#allocation4 + $0x18] sm:$0xff]
    %v60 = vld [vmem:[%s2] sm:$0x1]
    %v62 = vlaneseq
    %v63 = vshrl.u32 %v62, 7
    %v64 = vsub.s32 0, %v63
    %v65 = vrot.slane %v60, %v64
    %vm67 = vcmask 261120
    %v69 = vsel %vm67, %v54, 0
    %v72 = vsel %vm67, %v55, 0
    %74 = vmatprep.subr.mxu0 0.0
    %75 = vmatpush1.msra.mxu0 %v56
    %76 = vmatprep.subr.mxu0 0.0
    %77 = vmatpush1.msra.mxu0 %v57
    %78 = vmatprep.subr.mxu0 0.0
    %79 = vmatpush1.msra.mxu0 %v58
    %80 = vmatprep.subr.mxu0 0.0
    %81 = vmatpush1.msra.mxu0 %v59
    %82 = vmatprep.subr.mxu0 0.0
    %83 = vmatpush1.msra.mxu0 0.0
    %84 = vmatprep.subr.mxu0 0.0
    %85 = vmatpush1.msra.mxu0 0.0
    %86 = vmatprep.subr.mxu0 0.0
    %87 = vmatpush1.msra.mxu0 0.0
    %88 = vmatprep.subr.mxu0 0.0
    %89 = vmatpush1.msra.mxu0 0.0
    %90 = vmatprep.subr.mxu0 0.0
    %91 = vmatpush1.msra.mxu0 0.0
    %92 = vmatprep.subr.mxu0 0.0
    %93 = vmatpush1.msra.mxu0 0.0
    %94 = vmatprep.subr.mxu0 0.0
    %95 = vmatpush1.msra.mxu0 0.0
    %96 = vmatprep.subr.mxu0 0.0
    %97 = vmatpush1.msra.mxu0 0.0
    %98 = vmatprep.subr.mxu0 0.0
    %99 = vmatpush1.msra.mxu0 0.0
    %100 = vmatprep.subr.mxu0 0.0
    %101 = vmatpush1.msra.mxu0 0.0
    %102 = vmatprep.subr.mxu0 0.0
    %103 = vmatpush1.msra.mxu0 0.0
    %104 = vmatprep.subr.mxu0 0.0
    %105 = vmatpush1.msra.mxu0 0.0
    %106 = vmatprep.subr.mxu0 0.0
    %107 = vmatpush1.msra.mxu0 0.0
    %108 = vmatprep.subr.mxu0 0.0
    %109 = vmatpush1.msra.mxu0 0.0
    %110 = vmatprep.subr.mxu0 0.0
    %111 = vmatpush1.msra.mxu0 0.0
    %112 = vmatprep.subr.mxu0 0.0
    %113 = vmatpush1.msra.mxu0 0.0
    %114 = vmatprep.subr.mxu0 0.0
    %115 = vmatpush1.msra.mxu0 0.0
    %116 = vmatprep.subr.mxu0 0.0
    %117 = vmatpush1.msra.mxu0 0.0
    %118 = vmatprep.subr.mxu0 0.0
    %119 = vmatpush1.msra.mxu0 0.0
    %120 = vmatprep.subr.mxu0 0.0
    %121 = vmatpush1.msra.mxu0 0.0
    %122 = vmatprep.subr.mxu0 0.0
    %123 = vmatpush1.msra.mxu0 0.0
    %124 = vmatprep.subr.mxu0 0.0
    %125 = vmatpush1.msra.mxu0 0.0
    %126 = vmatprep.subr.mxu0 0.0
    %127 = vmatpush1.msra.mxu0 0.0
    %128 = vmatprep.subr.mxu0 0.0
    %129 = vmatpush1.msra.mxu0 0.0
    %130 = vmatprep.subr.mxu0 0.0
    %131 = vmatpush1.msra.mxu0 0.0
    %132 = vmatprep.subr.mxu0 0.0
    %133 = vmatpush1.msra.mxu0 0.0
    %134 = vmatprep.subr.mxu0 0.0
    %135 = vmatpush1.msra.mxu0 0.0
    %136 = vmatprep.subr.mxu0 0.0
    %137 = vmatpush1.msra.mxu0 0.0
    %138 = vmatprep.mubr.f32.mxu0 0.0
    %139 = vmatmul.mubr.f32.gmra.mrb[0].mxu0 %v69
    %v140 = vpop.f32.mrb[0].mxu0
    %v141 = vadd.f32 %v65, %v140
    %v142 = vpop.f32.mrb[0].mxu0
    %143 = vmatprep.mubr.f32.mxu0 0.0
    %144 = vmatmul.mubr.f32.gmra.mrb[0].mxu0 %v72
    %v145 = vpop.f32.mrb[0].mxu0
    %v146 = vadd.f32 %v65, %v145
    %v147 = vpop.f32.mrb[0].mxu0
    %148 = vdwg.mxu0
    %v149 = vmul.f32 %v141, 0.5
    %v150 = vmul.f32 %v146, 0.5
    %v151 = vmul.f32 %v141, 0.70710677
    %v152 = vmul.f32 %v146, 0.70710677
    %v153 = verf.f32.pop %v151
    %v154 = verf.f32.pop %v152
    %v155 = vadd.f32 %v153, 1.0
    %v156 = vadd.f32 %v154, 1.0
    %v157 = vmul.f32 %v149, %v155
    %v158 = vmul.f32 %v150, %v156
    %v159 = vsel %vm67, %v157, 0.0
    %160 = vadd.xlane.f32.xlu0 %v159
    %v161 = vpop.xlane.xlu0 %160
    %v162 = vsel %vm67, %v158, 0.0
    %163 = vadd.xlane.f32.xlu0 %v162
    %v164 = vpop.xlane.xlu0 %163
    %v165 = vrcp.pop 32.0
    %v166 = vmul.f32 %v161, %v165
    %v167 = vmul.f32 %v164, %v165
    %v168 = vsub.f32 %v157, %v166
    %v169 = vsub.f32 %v158, %v167
    %v170 = vmul.f32 %v168, %v168
    %v171 = vmul.f32 %v169, %v169
    %v172 = vsel %vm67, %v170, 0.0
    %173 = vadd.xlane.f32.xlu0 %v172
    %v174 = vpop.xlane.xlu0 %173
    %v175 = vsel %vm67, %v171, 0.0
    %176 = vadd.xlane.f32.xlu0 %v175
    %v177 = vpop.xlane.xlu0 %176
    %v178 = vmul.f32 %v174, %v165
    %v179 = vmul.f32 %v177, %v165
    %v180 = vadd.f32 %v178, 1e-12
    %v181 = vadd.f32 %v179, 1e-12
    %v182 = vrsqrt.pop %v180
    %v183 = vrsqrt.pop %v181
    %v184 = vmul.f32 %v168, %v182
    %v185 = vmul.f32 %v169, %v183
    %v186 = vld [vmem:[%s3] sm:$0x1]
    %v188 = vlaneseq
    %v189 = vshrl.u32 %v188, 7
    %v190 = vsub.s32 0, %v189
    %v191 = vrot.slane %v186, %v190
    %v193 = vmul.f32 %v184, %v191
    %v194 = vmul.f32 %v185, %v191
    %v195 = vld [vmem:[%s4] sm:$0x1]
    %v197 = vlaneseq
    %v198 = vshrl.u32 %v197, 7
    %v199 = vsub.s32 0, %v198
    %v200 = vrot.slane %v195, %v199
    %v202 = vadd.f32 %v193, %v200
    %v203 = vadd.f32 %v194, %v200
    %v204 = vld [vmem:[%s5] sm:$0x1]
    %v205 = vlaneseq
    %v206 = vshrl.u32 %v205, 7
    %v207 = vsub.s32 0, %v206
    %v208 = vrot.slane %v204, %v207
    %v209 = vmul.f32 %v202, %v208
    %v210 = vmul.f32 %v203, %v208
    %v211 = vsel %vm67, %v209, 0.0
    %212 = vadd.xlane.f32.xlu0 %v211
    %v213 = vpop.xlane.xlu0 %212
    %v214 = vsel %vm67, %v210, 0.0
    %215 = vadd.xlane.f32.xlu0 %v214
    %v216 = vpop.xlane.xlu0 %215
    %v217 = vld [vmem:[%s5 + $0x1] sm:$0x1]
    %v218 = vlaneseq
    %v219 = vshrl.u32 %v218, 7
    %v220 = vsub.s32 0, %v219
    %v221 = vrot.slane %v217, %v220
    %v222 = vmul.f32 %v202, %v221
    %v223 = vmul.f32 %v203, %v221
    %v224 = vsel %vm67, %v222, 0.0
    %225 = vadd.xlane.f32.xlu0 %v224
    %v226 = vpop.xlane.xlu0 %225
    %v227 = vsel %vm67, %v223, 0.0
    %228 = vadd.xlane.f32.xlu0 %v227
    %v229 = vpop.xlane.xlu0 %228
    %v230 = vlaneseq
    %v231 = vand.u32 %v230, 127
    %vm232 = vcmp.eq.s32.totalorder %v231, 0
    %v233 = vsel %vm232, %v213, %v226
    %v234 = vsel %vm232, %v216, %v229
    %v235 = vld [vmem:[%s6] sm:$0x1]
    %v237 = vlaneseq
    %v238 = vshrl.u32 %v237, 7
    %v239 = vsub.s32 0, %v238
    %v240 = vrot.slane %v235, %v239
    %v242 = vadd.f32 %v233, %v240
    %v243 = vadd.f32 %v234, %v240
    %vm244 = vcmask 15360
    %245 = vst.msk [vmem:[%s7] sm:$0xff] %vm244, %v242
    %246 = vst.msk [vmem:[%s7 + $0x8] sm:$0xff] %vm244, %v243
    // Predicated region
    $region38: #{tpu_custom_call.1} parent=1 // pred_check
      _
    $region39: #{tpu_custom_call.1} parent=1 // pred_check_branch
      %248 = sbr.rel (0) target = $region41
    $region40: #{tpu_custom_call.1} parent=1 // pred_region
      _
    $region41: #{tpu_custom_call.1} parent=1 // pred_fallthru
      _
    // Predicated region
    $region42: #{tpu_custom_call.1} parent=1 // pred_check
      _
    $region43: #{tpu_custom_call.1} parent=1 // pred_check_branch
      %250 = sbr.rel (0) target = $region45
    $region44: #{tpu_custom_call.1} parent=1 // pred_region
      _
    $region45: #{tpu_custom_call.1} parent=1 // pred_fallthru
      _
    %251 = vsyncpa [#allocation3], 1
    %252 = vsyncpa [#allocation5], 1

</llo_original>
